<compile_context>
chip_gen: v7x
topology: tpu7x:2x2x1
jax: 0.10.0
libtpu: 0.0.40
codegen_flags: <defaults>
</compile_context>

<pallas_src>
import math

import jax
import jax.numpy as jnp
from jax.experimental import pallas as pl
from jax.experimental.pallas import tpu as pltpu

# ----------------------------- model dimensions ------------------------------
B      = 2      # demo batch
DIN    = 64     # dim_input
EH     = 64     # e_hidden_dims = [64]
DH     = 64     # d_hidden_dims = [64]
MW     = 4      # maxout_window_size
LAT    = 8      # latent_size
K      = 2      # flow_layers_num (Planar)
G_E    = EH // MW
G_D    = DH // MW

TILE_B_MAX = 512   # throughput tile (multiple of 256; sweep 512-1024 if desired)
TILE_B_MIN = 32    # smallest throughput tile before giving up on a 2-step grid

LOG2PI = math.log(2.0 * math.pi)


def _round_up(n, m):
    return ((n + m - 1) // m) * m


def _choose_tile_b(bn):
    """Tile policy: latency path for tiny batches, else big tile with >=2 steps
    (keeps both v7x TensorCores busy via the 'parallel' grid axis)."""
    if bn <= 32:
        return max(16, _round_up(bn, 16))
    tile = TILE_B_MAX
    while tile > TILE_B_MIN and pl.cdiv(bn, tile) < 2:
        tile //= 2
    return tile


# --------------------------------- kernel ------------------------------------
def nf_vae_kernel(x_ref, eps_ref,
                  w1_ref, b1_ref, whead_ref, bhead_ref,
                  uhat_ref, fw_ref, fb_ref, wu_ref,
                  wd1_ref, bd1_ref, wd2_ref, bd2_ref,
                  xhat_ref, stats_ref):
    f32, bf16 = jnp.float32, jnp.bfloat16
    tb = x_ref.shape[0]

    # ---- Encoder MaxOut: one wide matmul, then max over MW contiguous blocks.
    xb = x_ref[...].astype(bf16)
    h_full = jnp.dot(xb, w1_ref[...], preferred_element_type=f32) + b1_ref[...]
    h = h_full[:, 0:G_E]
    for i in range(1, MW):
        h = jnp.maximum(h, h_full[:, i * G_E:(i + 1) * G_E])          # (tb, G_E)

    # ---- fused mu / log_var head: one (G_E, 2*LAT) matmul, then lane-slice.
    hb = h.astype(bf16)
    head = jnp.dot(hb, whead_ref[...], preferred_element_type=f32) + bhead_ref[...]
    mu      = head[:, 0:LAT]
    log_var = head[:, LAT:2 * LAT]

    # ---- reparameterize: z0 = mu + eps * exp(0.5 * log_var)  (all f32)
    eps = eps_ref[...]
    std = jnp.exp(0.5 * log_var)
    z0 = mu + eps * std                                                # (tb, LAT)

    # ---- Planar flows. u_hat (K,LAT) and sum(w*u_hat) (K,) precomputed outside.
    zk = z0
    ldj = jnp.zeros((tb, 1), f32)
    for k in range(K):
        u_hat = uhat_ref[k:k + 1, :]                                   # (1, LAT)
        w     = fw_ref[k:k + 1, :]                                     # (1, LAT)
        wz = jnp.sum(zk * w, axis=-1, keepdims=True) + fb_ref[k]       # (tb, 1)
        t = jnp.tanh(wz)
        zk = zk + u_hat * t                                            # (tb, LAT)
        det = 1.0 + (1.0 - t * t) * wu_ref[k]                          # (tb, 1)
        ldj = ldj + jnp.log(jnp.abs(det))

    # ---- Decoder MaxOut + output layer + sigmoid
    zb = zk.astype(bf16)
    g_full = jnp.dot(zb, wd1_ref[...], preferred_element_type=f32) + bd1_ref[...]
    g = g_full[:, 0:G_D]
    for i in range(1, MW):
        g = jnp.maximum(g, g_full[:, i * G_D:(i + 1) * G_D])           # (tb, G_D)
    gb = g.astype(bf16)
    logits = jnp.dot(gb, wd2_ref[...], preferred_element_type=f32) + bd2_ref[...]
    xhat_ref[...] = jax.nn.sigmoid(logits)                             # (tb, DIN)

    # ---- densities (fused: (z0-mu)/std == eps, log(std) == 0.5*log_var)
    logq = jnp.sum(-0.5 * eps * eps - 0.5 * log_var, axis=-1,
                   keepdims=True) - 0.5 * LAT * LOG2PI                 # (tb, 1)
    logp = jnp.sum(-0.5 * zk * zk, axis=-1,
                   keepdims=True) - 0.5 * LAT * LOG2PI                 # (tb, 1)
    # pack [logq, logp, ldj] into one lane-packed (tb, 3) store
    lane = jax.lax.broadcasted_iota(jnp.int32, (tb, 3), 1)
    stats_ref[...] = jnp.where(lane == 0, logq,
                               jnp.where(lane == 1, logp, ldj))


# --------------------------------- wrapper ------------------------------------
def nf_vae_forward(x, eps, kp):
    bn = x.shape[0]
    tile_b = _choose_tile_b(bn)
    nb = pl.cdiv(bn, tile_b)
    bp = nb * tile_b
    if bp != bn:
        x = jnp.pad(x, ((0, bp - bn), (0, 0)))
        eps = jnp.pad(eps, ((0, bp - bn), (0, 0)))

    (w1p, b1p, whead, bhead, uhat, fw, fb, wu, wd1p, bd1p, wd2, bd2) = kp

    def batch_spec(cols):
        return pl.BlockSpec((tile_b, cols), lambda i: (i, 0))

    def const_spec(arr):                      # weights: resident across grid steps
        return pl.BlockSpec(arr.shape, lambda i, _n=arr.ndim: (0,) * _n)

    smem_spec = pl.BlockSpec(memory_space=pltpu.MemorySpace.SMEM)

    in_specs = [
        batch_spec(DIN),                      # x
        batch_spec(LAT),                      # eps
        const_spec(w1p), const_spec(b1p),
        const_spec(whead), const_spec(bhead),
        const_spec(uhat), const_spec(fw),
        smem_spec, smem_spec,                 # fb (K,), wu (K,) scalars in SMEM
        const_spec(wd1p), const_spec(bd1p),
        const_spec(wd2), const_spec(bd2),
    ]
    out_specs = (batch_spec(DIN), batch_spec(3))
    out_shape = (jax.ShapeDtypeStruct((bp, DIN), jnp.float32),
                 jax.ShapeDtypeStruct((bp, 3), jnp.float32))

    flops = 2 * bp * (DIN * EH + G_E * 2 * LAT + LAT * DH + G_D * DIN)
    transcendentals = bp * (LAT + 2 * K + DIN)
    bytes_accessed = (sum(int(a.size) * a.dtype.itemsize for a in (x, eps) + tuple(kp))
                      + bp * (DIN + 3) * 4)

    fn = pl.pallas_call(
        nf_vae_kernel,
        out_shape=out_shape,
        grid_spec=pltpu.PrefetchScalarGridSpec(
            num_scalar_prefetch=0, grid=(nb,),
            in_specs=in_specs, out_specs=out_specs),
        compiler_params=pltpu.CompilerParams(
            dimension_semantics=("parallel",)),
        cost_estimate=pl.CostEstimate(
            flops=int(flops), transcendentals=int(transcendentals),
            bytes_accessed=int(bytes_accessed)),
    )
    x_hat, stats = fn(x, eps, *kp)
    return x_hat[:bn], stats[:bn, 0], stats[:bn, 1], stats[:bn, 2]


# --------------------------- parameters (canonical + packed) -------------------
def init_params(key):
    ks = jax.random.split(key, 12)
    sc = 0.1
    W1   = jax.random.normal(ks[0],  (DIN, EH), jnp.float32) * sc
    b1   = jax.random.normal(ks[1],  (EH,),     jnp.float32) * sc
    Wmu  = jax.random.normal(ks[2],  (G_E, LAT), jnp.float32) * sc
    bmu  = jax.random.normal(ks[3],  (1, LAT),  jnp.float32) * sc
    Wvar = jax.random.normal(ks[4],  (G_E, LAT), jnp.float32) * sc
    bvar = jax.random.normal(ks[5],  (1, LAT),  jnp.float32) * sc
    fu   = jax.random.normal(ks[6],  (K, LAT),  jnp.float32) * sc
    fw   = jax.random.normal(ks[7],  (K, LAT),  jnp.float32) * sc
    fb   = jax.random.normal(ks[8],  (K, 1),    jnp.float32) * sc
    Wd1  = jax.random.normal(ks[9],  (LAT, DH), jnp.float32) * sc
    bd1  = jax.random.normal(ks[10], (DH,),     jnp.float32) * sc
    Wd2  = jax.random.normal(ks[11], (G_D, DIN), jnp.float32) * sc
    bd2  = jnp.zeros((1, DIN), jnp.float32)
    return (W1, b1, Wmu, bmu, Wvar, bvar, fu, fw, fb, Wd1, bd1, Wd2, bd2)


def pack_params(raw):
    (W1, b1, Wmu, bmu, Wvar, bvar, fu, fw, fb, Wd1, bd1, Wd2, bd2) = raw
    # MaxOut glue: permute columns so phase-i occupies the contiguous block
    # [i*G, (i+1)*G); pooled feature g == max_i column (g*MW + i) of the original.
    W1p  = jnp.concatenate([W1[:, i::MW] for i in range(MW)], axis=1)      # (DIN, EH)
    b1p  = jnp.concatenate([b1[i::MW] for i in range(MW)], axis=0)[None, :]
    Wd1p = jnp.concatenate([Wd1[:, i::MW] for i in range(MW)], axis=1)     # (LAT, DH)
    bd1p = jnp.concatenate([bd1[i::MW] for i in range(MW)], axis=0)[None, :]
    # Fused mu/log_var head: one (G_E, 2*LAT) weight + (1, 2*LAT) bias.
    Whead = jnp.concatenate([Wmu, Wvar], axis=1)                           # (G_E, 2*LAT)
    bhead = jnp.concatenate([bmu, bvar], axis=1)                           # (1, 2*LAT)
    # Planar flow: data-independent u_hat and sum(w*u_hat) hoisted out of kernel.
    uw = jnp.sum(fu * fw, axis=-1, keepdims=True)                          # (K, 1)
    u_hat = fu + (-1.0 + jax.nn.softplus(uw) - uw) * fw / jnp.sum(
        fw * fw, axis=-1, keepdims=True)                                   # (K, LAT)
    wu_hat = jnp.sum(fw * u_hat, axis=-1)                                  # (K,)
    bf = lambda a: a.astype(jnp.bfloat16)
    return (bf(W1p), b1p, bf(Whead), bhead,
            u_hat, fw, fb[:, 0], wu_hat, bf(Wd1p), bd1p, bf(Wd2), bd2)


# ------------------------------ pure-JAX reference -----------------------------
def nf_vae_reference(x, eps, raw):
    (W1, b1, Wmu, bmu, Wvar, bvar, fu, fw, fb, Wd1, bd1, Wd2, bd2) = raw
    f32 = jnp.float32
    mm = lambda a, w: jnp.dot(a.astype(jnp.bfloat16), w.astype(jnp.bfloat16),
                              preferred_element_type=f32)
    bn = x.shape[0]
    h_full = mm(x, W1) + b1[None, :]
    h = jnp.max(h_full.reshape(bn, G_E, MW), axis=-1)        # MaxPool1d(MW, MW)
    mu = mm(h, Wmu) + bmu
    log_var = mm(h, Wvar) + bvar
    std = jnp.exp(0.5 * log_var)
    z0 = mu + eps * std
    zk, ldj = z0, jnp.zeros((bn,), f32)
    for k in range(K):
        u, w, b = fu[k:k + 1], fw[k:k + 1], fb[k, 0]
        uw = jnp.sum(u * w)
        u_hat = u + (-1.0 + jax.nn.softplus(uw) - uw) * w / jnp.sum(w * w)
        wz = jnp.sum(zk * w, -1, keepdims=True) + b
        t = jnp.tanh(wz)
        zk = zk + u_hat * t
        psi = (1.0 - t * t) * w
        ldj = ldj + jnp.log(jnp.abs(1.0 + jnp.sum(psi * u_hat, -1)))
    g_full = mm(zk, Wd1) + bd1[None, :]
    g = jnp.max(g_full.reshape(bn, G_D, MW), axis=-1)
    x_hat = jax.nn.sigmoid(mm(g, Wd2) + bd2)
    logq = jnp.sum(-0.5 * ((z0 - mu) / std) ** 2 - jnp.log(std) - 0.5 * LOG2PI, -1)
    logp = jnp.sum(-0.5 * zk * zk - 0.5 * LOG2PI, -1)
    return x_hat, logq, logp, ldj


# ----------------------------------- main --------------------------------------
if __name__ == "__main__":
    root = jax.random.PRNGKey(0)
    k_x, k_eps, k_p = jax.random.split(root, 3)

    x = jax.random.normal(k_x, (B, DIN), jnp.float32)
    # randomness of `reparameterize` (torch.randn_like) is passed explicitly
    eps = jax.random.normal(k_eps, (B, LAT), jnp.float32)
    raw_params = init_params(k_p)
    kparams = pack_params(raw_params)

    outs = jax.block_until_ready(nf_vae_forward(x, eps, kparams))
    refs = nf_vae_reference(x, eps, raw_params)

    for o, r in zip(outs, refs):
        assert o.shape == r.shape, (o.shape, r.shape)
        assert jnp.allclose(o, r, rtol=2e-3, atol=2e-3), float(jnp.max(jnp.abs(o - r)))

    print("KERNEL_OK")
</pallas_src>

<mosaic_0001>
module attributes {stable_mosaic.version = 11 : i64} {
  func.func @nf_vae_kernel(%arg0: i32, %arg1: memref<16x64xf32, #tpu.memory_space<vmem>>, %arg2: memref<16x8xf32, #tpu.memory_space<vmem>>, %arg3: memref<64x64xbf16, #tpu.memory_space<vmem>>, %arg4: memref<1x64xf32, #tpu.memory_space<vmem>>, %arg5: memref<16x16xbf16, #tpu.memory_space<vmem>>, %arg6: memref<1x16xf32, #tpu.memory_space<vmem>>, %arg7: memref<2x8xf32, #tpu.memory_space<vmem>>, %arg8: memref<2x8xf32, #tpu.memory_space<vmem>>, %arg9: memref<2xf32, #tpu.memory_space<smem>>, %arg10: memref<2xf32, #tpu.memory_space<smem>>, %arg11: memref<8x64xbf16, #tpu.memory_space<vmem>>, %arg12: memref<1x64xf32, #tpu.memory_space<vmem>>, %arg13: memref<16x64xbf16, #tpu.memory_space<vmem>>, %arg14: memref<1x64xf32, #tpu.memory_space<vmem>>, %arg15: memref<16x64xf32, #tpu.memory_space<vmem>>, %arg16: memref<16x3xf32, #tpu.memory_space<vmem>>) attributes {dimension_semantics = [#tpu.dimension_semantics<parallel>], iteration_bounds = array<i64: 1>, scalar_prefetch = 0 : i64, scratch_operands = 0 : i64, tpu.core_type = #tpu.core_type<tc>, window_params = [{transform_indices = @transform_0, window_bounds = array<i64: 16, 64>}, {transform_indices = @transform_1, window_bounds = array<i64: 16, 8>}, {pipeline_mode = #tpu.pipeline_mode<synchronous>, transform_indices = @transform_2, window_bounds = array<i64: 64, 64>}, {pipeline_mode = #tpu.pipeline_mode<synchronous>, transform_indices = @transform_3, window_bounds = array<i64: 1, 64>}, {pipeline_mode = #tpu.pipeline_mode<synchronous>, transform_indices = @transform_4, window_bounds = array<i64: 16, 16>}, {pipeline_mode = #tpu.pipeline_mode<synchronous>, transform_indices = @transform_5, window_bounds = array<i64: 1, 16>}, {pipeline_mode = #tpu.pipeline_mode<synchronous>, transform_indices = @transform_6, window_bounds = array<i64: 2, 8>}, {pipeline_mode = #tpu.pipeline_mode<synchronous>, transform_indices = @transform_7, window_bounds = array<i64: 2, 8>}, {transform_indices = @transform_8, window_bounds = array<i64: 2>}, {transform_indices = @transform_9, window_bounds = array<i64: 2>}, {pipeline_mode = #tpu.pipeline_mode<synchronous>, transform_indices = @transform_10, window_bounds = array<i64: 8, 64>}, {pipeline_mode = #tpu.pipeline_mode<synchronous>, transform_indices = @transform_11, window_bounds = array<i64: 1, 64>}, {pipeline_mode = #tpu.pipeline_mode<synchronous>, transform_indices = @transform_12, window_bounds = array<i64: 16, 64>}, {pipeline_mode = #tpu.pipeline_mode<synchronous>, transform_indices = @transform_13, window_bounds = array<i64: 1, 64>}, {transform_indices = @transform_14, window_bounds = array<i64: 16, 64>}, {transform_indices = @transform_15, window_bounds = array<i64: 16, 3>}]} {
    %c0 = arith.constant 0 : index
    %c0_0 = arith.constant 0 : index
    %0 = vector.load %arg1[%c0, %c0_0] : memref<16x64xf32, #tpu.memory_space<vmem>>, vector<16x64xf32>
    %1 = arith.truncf %0 : vector<16x64xf32> to vector<16x64xbf16>
    %c0_1 = arith.constant 0 : index
    %c0_2 = arith.constant 0 : index
    %2 = vector.load %arg3[%c0_1, %c0_2] : memref<64x64xbf16, #tpu.memory_space<vmem>>, vector<64x64xbf16>
    %cst = arith.constant dense<0.000000e+00> : vector<16x64xf32>
    %3 = tpu.matmul %1, %2, %cst {dimension_numbers = #tpu.dot_dimension_numbers<[1], [0], [0], [1], [0, 0, 1, 1], [], []>} : vector<16x64xbf16>, vector<64x64xbf16>, vector<16x64xf32> -> vector<16x64xf32>
    %c0_3 = arith.constant 0 : index
    %c0_4 = arith.constant 0 : index
    %4 = vector.load %arg4[%c0_3, %c0_4] : memref<1x64xf32, #tpu.memory_space<vmem>>, vector<1x64xf32>
    %5 = vector.broadcast %4 : vector<1x64xf32> to vector<16x64xf32>
    %6 = arith.addf %3, %5 : vector<16x64xf32>
    %7 = vector.extract_strided_slice %6 {offsets = [0, 0], sizes = [16, 16], strides = [1, 1]} : vector<16x64xf32> to vector<16x16xf32>
    %8 = vector.extract_strided_slice %6 {offsets = [0, 16], sizes = [16, 16], strides = [1, 1]} : vector<16x64xf32> to vector<16x16xf32>
    %9 = arith.maximumf %7, %8 : vector<16x16xf32>
    %10 = vector.extract_strided_slice %6 {offsets = [0, 32], sizes = [16, 16], strides = [1, 1]} : vector<16x64xf32> to vector<16x16xf32>
    %11 = arith.maximumf %9, %10 : vector<16x16xf32>
    %12 = vector.extract_strided_slice %6 {offsets = [0, 48], sizes = [16, 16], strides = [1, 1]} : vector<16x64xf32> to vector<16x16xf32>
    %13 = arith.maximumf %11, %12 : vector<16x16xf32>
    %14 = arith.truncf %13 : vector<16x16xf32> to vector<16x16xbf16>
    %c0_5 = arith.constant 0 : index
    %c0_6 = arith.constant 0 : index
    %15 = vector.load %arg5[%c0_5, %c0_6] : memref<16x16xbf16, #tpu.memory_space<vmem>>, vector<16x16xbf16>
    %cst_7 = arith.constant dense<0.000000e+00> : vector<16x16xf32>
    %16 = tpu.matmul %14, %15, %cst_7 {dimension_numbers = #tpu.dot_dimension_numbers<[1], [0], [0], [1], [0, 0, 1, 1], [], []>} : vector<16x16xbf16>, vector<16x16xbf16>, vector<16x16xf32> -> vector<16x16xf32>
    %c0_8 = arith.constant 0 : index
    %c0_9 = arith.constant 0 : index
    %17 = vector.load %arg6[%c0_8, %c0_9] : memref<1x16xf32, #tpu.memory_space<vmem>>, vector<1x16xf32>
    %18 = vector.broadcast %17 : vector<1x16xf32> to vector<16x16xf32>
    %19 = arith.addf %16, %18 : vector<16x16xf32>
    %20 = vector.extract_strided_slice %19 {offsets = [0, 0], sizes = [16, 8], strides = [1, 1]} : vector<16x16xf32> to vector<16x8xf32>
    %21 = vector.extract_strided_slice %19 {offsets = [0, 8], sizes = [16, 8], strides = [1, 1]} : vector<16x16xf32> to vector<16x8xf32>
    %c0_10 = arith.constant 0 : index
    %c0_11 = arith.constant 0 : index
    %22 = vector.load %arg2[%c0_10, %c0_11] : memref<16x8xf32, #tpu.memory_space<vmem>>, vector<16x8xf32>
    %cst_12 = arith.constant 5.000000e-01 : f32
    %23 = vector.broadcast %cst_12 : f32 to vector<16x8xf32>
    %24 = arith.mulf %23, %21 : vector<16x8xf32>
    %25 = math.exp %24 : vector<16x8xf32>
    %26 = arith.mulf %22, %25 : vector<16x8xf32>
    %27 = arith.addf %20, %26 : vector<16x8xf32>
    %cst_13 = arith.constant 0.000000e+00 : f32
    %28 = vector.broadcast %cst_13 : f32 to vector<16x1xf32>
    %c0_14 = arith.constant 0 : index
    %c0_15 = arith.constant 0 : index
    %29 = vector.load %arg7[%c0_14, %c0_15] : memref<2x8xf32, #tpu.memory_space<vmem>>, vector<1x8xf32>
    %c0_16 = arith.constant 0 : index
    %c0_17 = arith.constant 0 : index
    %30 = vector.load %arg8[%c0_16, %c0_17] : memref<2x8xf32, #tpu.memory_space<vmem>>, vector<1x8xf32>
    %31 = vector.broadcast %30 : vector<1x8xf32> to vector<16x8xf32>
    %32 = arith.mulf %27, %31 : vector<16x8xf32>
    %cst_18 = arith.constant dense<0.000000e+00> : vector<16xf32>
    %33 = vector.multi_reduction <add>, %32, %cst_18 [1] : vector<16x8xf32> to vector<16xf32>
    %34 = vector.shape_cast %33 : vector<16xf32> to vector<16x1xf32>
    %c0_19 = arith.constant 0 : index
    %35 = memref.load %arg9[%c0_19] : memref<2xf32, #tpu.memory_space<smem>>
    %36 = vector.broadcast %35 : f32 to vector<16x1xf32>
    %37 = arith.addf %34, %36 : vector<16x1xf32>
    %38 = math.tanh %37 : vector<16x1xf32>
    %39 = vector.broadcast %29 : vector<1x8xf32> to vector<16x8xf32>
    %40 = vector.broadcast %38 : vector<16x1xf32> to vector<16x8xf32>
    %41 = arith.mulf %39, %40 : vector<16x8xf32>
    %42 = arith.addf %27, %41 : vector<16x8xf32>
    %43 = arith.mulf %38, %38 : vector<16x1xf32>
    %cst_20 = arith.constant 1.000000e+00 : f32
    %44 = vector.broadcast %cst_20 : f32 to vector<16x1xf32>
    %45 = arith.subf %44, %43 : vector<16x1xf32>
    %c0_21 = arith.constant 0 : index
    %46 = memref.load %arg10[%c0_21] : memref<2xf32, #tpu.memory_space<smem>>
    %47 = vector.broadcast %46 : f32 to vector<16x1xf32>
    %48 = arith.mulf %45, %47 : vector<16x1xf32>
    %cst_22 = arith.constant 1.000000e+00 : f32
    %49 = vector.broadcast %cst_22 : f32 to vector<16x1xf32>
    %50 = arith.addf %49, %48 : vector<16x1xf32>
    %51 = math.absf %50 : vector<16x1xf32>
    %52 = math.log %51 : vector<16x1xf32>
    %53 = arith.addf %28, %52 : vector<16x1xf32>
    %c1 = arith.constant 1 : index
    %c0_23 = arith.constant 0 : index
    %54 = vector.load %arg7[%c1, %c0_23] : memref<2x8xf32, #tpu.memory_space<vmem>>, vector<1x8xf32>
    %c1_24 = arith.constant 1 : index
    %c0_25 = arith.constant 0 : index
    %55 = vector.load %arg8[%c1_24, %c0_25] : memref<2x8xf32, #tpu.memory_space<vmem>>, vector<1x8xf32>
    %56 = vector.broadcast %55 : vector<1x8xf32> to vector<16x8xf32>
    %57 = arith.mulf %42, %56 : vector<16x8xf32>
    %cst_26 = arith.constant dense<0.000000e+00> : vector<16xf32>
    %58 = vector.multi_reduction <add>, %57, %cst_26 [1] : vector<16x8xf32> to vector<16xf32>
    %59 = vector.shape_cast %58 : vector<16xf32> to vector<16x1xf32>
    %c1_27 = arith.constant 1 : index
    %60 = memref.load %arg9[%c1_27] : memref<2xf32, #tpu.memory_space<smem>>
    %61 = vector.broadcast %60 : f32 to vector<16x1xf32>
    %62 = arith.addf %59, %61 : vector<16x1xf32>
    %63 = math.tanh %62 : vector<16x1xf32>
    %64 = vector.broadcast %54 : vector<1x8xf32> to vector<16x8xf32>
    %65 = vector.broadcast %63 : vector<16x1xf32> to vector<16x8xf32>
    %66 = arith.mulf %64, %65 : vector<16x8xf32>
    %67 = arith.addf %42, %66 : vector<16x8xf32>
    %68 = arith.mulf %63, %63 : vector<16x1xf32>
    %cst_28 = arith.constant 1.000000e+00 : f32
    %69 = vector.broadcast %cst_28 : f32 to vector<16x1xf32>
    %70 = arith.subf %69, %68 : vector<16x1xf32>
    %c1_29 = arith.constant 1 : index
    %71 = memref.load %arg10[%c1_29] : memref<2xf32, #tpu.memory_space<smem>>
    %72 = vector.broadcast %71 : f32 to vector<16x1xf32>
    %73 = arith.mulf %70, %72 : vector<16x1xf32>
    %cst_30 = arith.constant 1.000000e+00 : f32
    %74 = vector.broadcast %cst_30 : f32 to vector<16x1xf32>
    %75 = arith.addf %74, %73 : vector<16x1xf32>
    %76 = math.absf %75 : vector<16x1xf32>
    %77 = math.log %76 : vector<16x1xf32>
    %78 = arith.addf %53, %77 : vector<16x1xf32>
    %79 = arith.truncf %67 : vector<16x8xf32> to vector<16x8xbf16>
    %c0_31 = arith.constant 0 : index
    %c0_32 = arith.constant 0 : index
    %80 = vector.load %arg11[%c0_31, %c0_32] : memref<8x64xbf16, #tpu.memory_space<vmem>>, vector<8x64xbf16>
    %cst_33 = arith.constant dense<0.000000e+00> : vector<16x64xf32>
    %81 = tpu.matmul %79, %80, %cst_33 {dimension_numbers = #tpu.dot_dimension_numbers<[1], [0], [0], [1], [0, 0, 1, 1], [], []>} : vector<16x8xbf16>, vector<8x64xbf16>, vector<16x64xf32> -> vector<16x64xf32>
    %c0_34 = arith.constant 0 : index
    %c0_35 = arith.constant 0 : index
    %82 = vector.load %arg12[%c0_34, %c0_35] : memref<1x64xf32, #tpu.memory_space<vmem>>, vector<1x64xf32>
    %83 = vector.broadcast %82 : vector<1x64xf32> to vector<16x64xf32>
    %84 = arith.addf %81, %83 : vector<16x64xf32>
    %85 = vector.extract_strided_slice %84 {offsets = [0, 0], sizes = [16, 16], strides = [1, 1]} : vector<16x64xf32> to vector<16x16xf32>
    %86 = vector.extract_strided_slice %84 {offsets = [0, 16], sizes = [16, 16], strides = [1, 1]} : vector<16x64xf32> to vector<16x16xf32>
    %87 = arith.maximumf %85, %86 : vector<16x16xf32>
    %88 = vector.extract_strided_slice %84 {offsets = [0, 32], sizes = [16, 16], strides = [1, 1]} : vector<16x64xf32> to vector<16x16xf32>
    %89 = arith.maximumf %87, %88 : vector<16x16xf32>
    %90 = vector.extract_strided_slice %84 {offsets = [0, 48], sizes = [16, 16], strides = [1, 1]} : vector<16x64xf32> to vector<16x16xf32>
    %91 = arith.maximumf %89, %90 : vector<16x16xf32>
    %92 = arith.truncf %91 : vector<16x16xf32> to vector<16x16xbf16>
    %c0_36 = arith.constant 0 : index
    %c0_37 = arith.constant 0 : index
    %93 = vector.load %arg13[%c0_36, %c0_37] : memref<16x64xbf16, #tpu.memory_space<vmem>>, vector<16x64xbf16>
    %cst_38 = arith.constant dense<0.000000e+00> : vector<16x64xf32>
    %94 = tpu.matmul %92, %93, %cst_38 {dimension_numbers = #tpu.dot_dimension_numbers<[1], [0], [0], [1], [0, 0, 1, 1], [], []>} : vector<16x16xbf16>, vector<16x64xbf16>, vector<16x64xf32> -> vector<16x64xf32>
    %c0_39 = arith.constant 0 : index
    %c0_40 = arith.constant 0 : index
    %95 = vector.load %arg14[%c0_39, %c0_40] : memref<1x64xf32, #tpu.memory_space<vmem>>, vector<1x64xf32>
    %96 = vector.broadcast %95 : vector<1x64xf32> to vector<16x64xf32>
    %97 = arith.addf %94, %96 : vector<16x64xf32>
    %98 = arith.negf %97 : vector<16x64xf32>
    %99 = math.exp %98 : vector<16x64xf32>
    %cst_41 = arith.constant 1.000000e+00 : f32
    %100 = vector.broadcast %cst_41 : f32 to vector<16x64xf32>
    %101 = arith.addf %100, %99 : vector<16x64xf32>
    %102 = arith.divf %100, %101 : vector<16x64xf32>
    %c0_42 = arith.constant 0 : index
    %c0_43 = arith.constant 0 : index
    %103 = vector.load %arg15[%c0_42, %c0_43] : memref<16x64xf32, #tpu.memory_space<vmem>>, vector<16x64xf32>
    tpu.vector_store %arg15[%c0_42, %c0_43], %102 {strides = array<i32>} : memref<16x64xf32, #tpu.memory_space<vmem>>, vector<16x64xf32>,
    %cst_44 = arith.constant -5.000000e-01 : f32
    %104 = vector.broadcast %cst_44 : f32 to vector<16x8xf32>
    %105 = arith.mulf %104, %22 : vector<16x8xf32>
    %106 = arith.mulf %105, %22 : vector<16x8xf32>
    %cst_45 = arith.constant 5.000000e-01 : f32
    %107 = vector.broadcast %cst_45 : f32 to vector<16x8xf32>
    %108 = arith.mulf %107, %21 : vector<16x8xf32>
    %109 = arith.subf %106, %108 : vector<16x8xf32>
    %cst_46 = arith.constant dense<0.000000e+00> : vector<16xf32>
    %110 = vector.multi_reduction <add>, %109, %cst_46 [1] : vector<16x8xf32> to vector<16xf32>
    %111 = vector.shape_cast %110 : vector<16xf32> to vector<16x1xf32>
    %cst_47 = arith.constant 7.35150814 : f32
    %112 = vector.broadcast %cst_47 : f32 to vector<16x1xf32>
    %113 = arith.subf %111, %112 : vector<16x1xf32>
    %cst_48 = arith.constant -5.000000e-01 : f32
    %114 = vector.broadcast %cst_48 : f32 to vector<16x8xf32>
    %115 = arith.mulf %114, %67 : vector<16x8xf32>
    %116 = arith.mulf %115, %67 : vector<16x8xf32>
    %cst_49 = arith.constant dense<0.000000e+00> : vector<16xf32>
    %117 = vector.multi_reduction <add>, %116, %cst_49 [1] : vector<16x8xf32> to vector<16xf32>
    %118 = vector.shape_cast %117 : vector<16xf32> to vector<16x1xf32>
    %cst_50 = arith.constant 7.35150814 : f32
    %119 = vector.broadcast %cst_50 : f32 to vector<16x1xf32>
    %120 = arith.subf %118, %119 : vector<16x1xf32>
    %121 = tpu.iota {dimensions = array<i32: 1>} : vector<16x3xi32>
    %c0_i32 = arith.constant 0 : i32
    %122 = vector.broadcast %c0_i32 : i32 to vector<16x3xi32>
    %123 = arith.cmpi eq, %121, %122 : vector<16x3xi32>
    %c1_i32 = arith.constant 1 : i32
    %124 = vector.broadcast %c1_i32 : i32 to vector<16x3xi32>
    %125 = arith.cmpi eq, %121, %124 : vector<16x3xi32>
    %126 = vector.shape_cast %120 : vector<16x1xf32> to vector<16x1xf32>
    %127 = vector.broadcast %126 : vector<16x1xf32> to vector<16x3xf32>
    %128 = vector.shape_cast %78 : vector<16x1xf32> to vector<16x1xf32>
    %129 = vector.broadcast %128 : vector<16x1xf32> to vector<16x3xf32>
    %130 = arith.select %125, %127, %129 : vector<16x3xi1>, vector<16x3xf32>
    %131 = vector.shape_cast %113 : vector<16x1xf32> to vector<16x1xf32>
    %132 = vector.broadcast %131 : vector<16x1xf32> to vector<16x3xf32>
    %133 = arith.select %123, %132, %130 : vector<16x3xi1>, vector<16x3xf32>
    %c0_51 = arith.constant 0 : index
    %c0_52 = arith.constant 0 : index
    %134 = vector.load %arg16[%c0_51, %c0_52] : memref<16x3xf32, #tpu.memory_space<vmem>>, vector<16x3xf32>
    tpu.vector_store %arg16[%c0_51, %c0_52], %133 {strides = array<i32>} : memref<16x3xf32, #tpu.memory_space<vmem>>, vector<16x3xf32>,
    return
  }
  func.func @transform_0(%arg0: i32) -> (i32, i32) {
    %c0_i32 = arith.constant 0 : i32
    %c0_i32_0 = arith.constant 0 : i32
    return %arg0, %c0_i32 : i32, i32
  }
  func.func @transform_1(%arg0: i32) -> (i32, i32) {
    %c0_i32 = arith.constant 0 : i32
    %c0_i32_0 = arith.constant 0 : i32
    return %arg0, %c0_i32 : i32, i32
  }
  func.func @transform_2(%arg0: i32) -> (i32, i32) {
    %c0_i32 = arith.constant 0 : i32
    %c0_i32_0 = arith.constant 0 : i32
    %c0_i32_1 = arith.constant 0 : i32
    return %c0_i32, %c0_i32_0 : i32, i32
  }
  func.func @transform_3(%arg0: i32) -> (i32, i32) {
    %c0_i32 = arith.constant 0 : i32
    %c0_i32_0 = arith.constant 0 : i32
    %c0_i32_1 = arith.constant 0 : i32
    return %c0_i32, %c0_i32_0 : i32, i32
  }
  func.func @transform_4(%arg0: i32) -> (i32, i32) {
    %c0_i32 = arith.constant 0 : i32
    %c0_i32_0 = arith.constant 0 : i32
    %c0_i32_1 = arith.constant 0 : i32
    return %c0_i32, %c0_i32_0 : i32, i32
  }
  func.func @transform_5(%arg0: i32) -> (i32, i32) {
    %c0_i32 = arith.constant 0 : i32
    %c0_i32_0 = arith.constant 0 : i32
    %c0_i32_1 = arith.constant 0 : i32
    return %c0_i32, %c0_i32_0 : i32, i32
  }
  func.func @transform_6(%arg0: i32) -> (i32, i32) {
    %c0_i32 = arith.constant 0 : i32
    %c0_i32_0 = arith.constant 0 : i32
    %c0_i32_1 = arith.constant 0 : i32
    return %c0_i32, %c0_i32_0 : i32, i32
  }
  func.func @transform_7(%arg0: i32) -> (i32, i32) {
    %c0_i32 = arith.constant 0 : i32
    %c0_i32_0 = arith.constant 0 : i32
    %c0_i32_1 = arith.constant 0 : i32
    return %c0_i32, %c0_i32_0 : i32, i32
  }
  func.func @transform_8(%arg0: i32) -> i32 {
    %c0_i32 = arith.constant 0 : i32
    %c0_i32_0 = arith.constant 0 : i32
    return %c0_i32 : i32
  }
  func.func @transform_9(%arg0: i32) -> i32 {
    %c0_i32 = arith.constant 0 : i32
    %c0_i32_0 = arith.constant 0 : i32
    return %c0_i32 : i32
  }
  func.func @transform_10(%arg0: i32) -> (i32, i32) {
    %c0_i32 = arith.constant 0 : i32
    %c0_i32_0 = arith.constant 0 : i32
    %c0_i32_1 = arith.constant 0 : i32
    return %c0_i32, %c0_i32_0 : i32, i32
  }
  func.func @transform_11(%arg0: i32) -> (i32, i32) {
    %c0_i32 = arith.constant 0 : i32
    %c0_i32_0 = arith.constant 0 : i32
    %c0_i32_1 = arith.constant 0 : i32
    return %c0_i32, %c0_i32_0 : i32, i32
  }
  func.func @transform_12(%arg0: i32) -> (i32, i32) {
    %c0_i32 = arith.constant 0 : i32
    %c0_i32_0 = arith.constant 0 : i32
    %c0_i32_1 = arith.constant 0 : i32
    return %c0_i32, %c0_i32_0 : i32, i32
  }
  func.func @transform_13(%arg0: i32) -> (i32, i32) {
    %c0_i32 = arith.constant 0 : i32
    %c0_i32_0 = arith.constant 0 : i32
    %c0_i32_1 = arith.constant 0 : i32
    return %c0_i32, %c0_i32_0 : i32, i32
  }
  func.func @transform_14(%arg0: i32) -> (i32, i32) {
    %c0_i32 = arith.constant 0 : i32
    %c0_i32_0 = arith.constant 0 : i32
    return %arg0, %c0_i32 : i32, i32
  }
  func.func @transform_15(%arg0: i32) -> (i32, i32) {
    %c0_i32 = arith.constant 0 : i32
    %c0_i32_0 = arith.constant 0 : i32
    return %arg0, %c0_i32 : i32, i32
  }
}

</mosaic_0001>

<llo_original>
// kernel: tpu_custom_call.1
$region0: #{tpu_custom_call.1}
  #allocation0 [shape = 'u32[]', space=smem, size = 0x4, offset = 0x4, fixed_abs, tag = 'smem constant byte address 0x4 - core index']
  #allocation1 [shape = 'u32[144,128]{1,0:T(1,128)}', space=vmem, size = 0x12000, scoped, tag = 'internal scratch']
  %s0 = inlined_call_operand.vmem [shape: f32[16,64], index: 0, kind: input, shape index: {}]
  %s1 = inlined_call_operand.vmem [shape: f32[16,8], index: 1, kind: input, shape index: {}]
  %s2 = inlined_call_operand.hbm [shape: bf16[64,64], index: 2, kind: input, shape index: {}]
  %s3 = inlined_call_operand.vmem [shape: f32[1,64], index: 3, kind: input, shape index: {}]
  %s4 = inlined_call_operand.vmem [shape: bf16[16,16], index: 4, kind: input, shape index: {}]
  %s5 = inlined_call_operand.vmem [shape: f32[1,16], index: 5, kind: input, shape index: {}]
  %s6 = inlined_call_operand.vmem [shape: f32[2,8], index: 6, kind: input, shape index: {}]
  %s7 = inlined_call_operand.vmem [shape: f32[2,8], index: 7, kind: input, shape index: {}]
  %s8 = inlined_call_operand.vmem [shape: f32[2], index: 8, kind: input, shape index: {}]
  %s9 = inlined_call_operand.vmem [shape: f32[2], index: 9, kind: input, shape index: {}]
  %s10 = inlined_call_operand.vmem [shape: bf16[8,64], index: 10, kind: input, shape index: {}]
  %s11 = inlined_call_operand.vmem [shape: f32[1,64], index: 11, kind: input, shape index: {}]
  %s12 = inlined_call_operand.vmem [shape: bf16[16,64], index: 12, kind: input, shape index: {}]
  %s13 = inlined_call_operand.vmem [shape: f32[1,64], index: 13, kind: input, shape index: {}]
  %s14 = inlined_call_operand.hbm [shape: f32[16,64], index: 14, kind: output, shape index: {0}]
  %s15 = inlined_call_operand.vmem [shape: f32[16,3], index: 15, kind: output, shape index: {1}]
  %16 = xla_tuple %s14, %s15
  %s17 = sld [smem:[#allocation0]]
  $region86: #{tpu_custom_call.1} parent=0
    _
  %s19 = ssub.s32 1, %s17
  %s20 = scalar_select 0, %s19, %s17
  $region1: #{tpu_custom_call.1} parent=0
    #allocation2 [shape = 'u8[16384]{0}', space=vmem, size = 0x4000, scoped, tag = 'input window, operand 2, single buffered']
    #allocation3 [shape = 's32[1]{0}', space=sflag, size = 0x4, scoped, tag = 'scoped memory for tpu_custom_call.1']
    #allocation4 [shape = 's32[1]{0}', space=sflag, size = 0x4, scoped, tag = 'scoped memory for tpu_custom_call.1']
    #allocation5 [shape = 's32[1]{0}', space=sflag, size = 0x4, scoped, tag = 'scoped memory for tpu_custom_call.1']
    #allocation6 [shape = 'u8[512]{0}', space=smem, size = 0x200, scoped, tag = 'input window, operand 8, single buffered']
    #allocation7 [shape = 'u8[512]{0}', space=smem, size = 0x200, scoped, tag = 'input window, operand 9, single buffered']
    #allocation8 [shape = 's32[1]{0}', space=sflag, size = 0x4, scoped, tag = 'scoped memory for tpu_custom_call.1']
    #allocation9 [shape = 'u8[8192]{0}', space=vmem, size = 0x2000, scoped, tag = 'output window, operand 0, single buffered']
    %21 = vsyncpa [#allocation3], 0
    %22 = vsyncpa [#allocation5], 0
    %23 = vsyncpa [#allocation8], 0
    %24 = vsyncpa [#allocation4], 0
    // Predicated region
    $region2: #{tpu_custom_call.1} parent=1 // pred_check
      _
    $region3: #{tpu_custom_call.1} parent=1 // pred_check_branch
      %26 = sbr.rel (0) target = $region5
    $region4: #{tpu_custom_call.1} parent=1 // pred_region
      _
    $region5: #{tpu_custom_call.1} parent=1 // pred_fallthru
      _
    // Predicated region
    $region6: #{tpu_custom_call.1} parent=1 // pred_check
      _
    $region7: #{tpu_custom_call.1} parent=1 // pred_check_branch
      %28 = sbr.rel (0) target = $region9
    $region8: #{tpu_custom_call.1} parent=1 // pred_region
      _
    $region9: #{tpu_custom_call.1} parent=1 // pred_fallthru
      _
    // Predicated region
    $region10: #{tpu_custom_call.1} parent=1 // pred_check
      _
    $region11: #{tpu_custom_call.1} parent=1 // pred_check_branch
      %30 = sbr.rel (0) target = $region13
    $region12: #{tpu_custom_call.1} parent=1 // pred_region
      %s32 = ssub.s32 512, 512
      %33 = vsyncadd [#allocation3], %s32
      %s34 = sshll.u32 [#allocation2], 4
      %s35 = int_to_ptr.vmem [resolvable:$true] %s34
      %40 = dma.hbm_to_vmem [thread:$0]  %s2, 512, %s35, [#allocation3], 64, 64, 4
    $region13: #{tpu_custom_call.1} parent=1 // pred_fallthru
      _
    // Predicated region
    $region14: #{tpu_custom_call.1} parent=1 // pred_check
      _
    $region15: #{tpu_custom_call.1} parent=1 // pred_check_branch
      %42 = sbr.rel (0) target = $region17
    $region16: #{tpu_custom_call.1} parent=1 // pred_region
      _
    $region17: #{tpu_custom_call.1} parent=1 // pred_fallthru
      _
    // Predicated region
    $region18: #{tpu_custom_call.1} parent=1 // pred_check
      _
    $region19: #{tpu_custom_call.1} parent=1 // pred_check_branch
      %44 = sbr.rel (0) target = $region21
    $region20: #{tpu_custom_call.1} parent=1 // pred_region
      _
    $region21: #{tpu_custom_call.1} parent=1 // pred_fallthru
      _
    // Predicated region
    $region22: #{tpu_custom_call.1} parent=1 // pred_check
      _
    $region23: #{tpu_custom_call.1} parent=1 // pred_check_branch
      %46 = sbr.rel (0) target = $region25
    $region24: #{tpu_custom_call.1} parent=1 // pred_region
      _
    $region25: #{tpu_custom_call.1} parent=1 // pred_fallthru
      _
    // Predicated region
    $region26: #{tpu_custom_call.1} parent=1 // pred_check
      _
    $region27: #{tpu_custom_call.1} parent=1 // pred_check_branch
      %48 = sbr.rel (0) target = $region29
    $region28: #{tpu_custom_call.1} parent=1 // pred_region
      _
    $region29: #{tpu_custom_call.1} parent=1 // pred_fallthru
      _
    // Predicated region
    $region30: #{tpu_custom_call.1} parent=1 // pred_check
      _
    $region31: #{tpu_custom_call.1} parent=1 // pred_check_branch
      %50 = sbr.rel (0) target = $region33
    $region32: #{tpu_custom_call.1} parent=1 // pred_region
      _
    $region33: #{tpu_custom_call.1} parent=1 // pred_fallthru
      _
    // Predicated region
    $region34: #{tpu_custom_call.1} parent=1 // pred_check
      _
    $region35: #{tpu_custom_call.1} parent=1 // pred_check_branch
      %52 = sbr.rel (0) target = $region37
    $region36: #{tpu_custom_call.1} parent=1 // pred_region
      %s54 = ssub.s32 16, 16
      %55 = vsyncadd [#allocation5], %s54
      %s57 = sshll.u32 %s8, 4
      %s58 = int_to_ptr.vmem [resolvable:$true] %s57
      %60 = dma.vmem_to_smem %s58, 16, [#allocation6], [#allocation5]
    $region37: #{tpu_custom_call.1} parent=1 // pred_fallthru
      _
    // Predicated region
    $region38: #{tpu_custom_call.1} parent=1 // pred_check
      _
    $region39: #{tpu_custom_call.1} parent=1 // pred_check_branch
      %62 = sbr.rel (0) target = $region41
    $region40: #{tpu_custom_call.1} parent=1 // pred_region
      %s64 = ssub.s32 16, 16
      %65 = vsyncadd [#allocation8], %s64
      %s67 = sshll.u32 %s9, 4
      %s68 = int_to_ptr.vmem [resolvable:$true] %s67
      %70 = dma.vmem_to_smem %s68, 16, [#allocation7], [#allocation8]
    $region41: #{tpu_custom_call.1} parent=1 // pred_fallthru
      _
    // Predicated region
    $region42: #{tpu_custom_call.1} parent=1 // pred_check
      _
    $region43: #{tpu_custom_call.1} parent=1 // pred_check_branch
      %72 = sbr.rel (0) target = $region45
    $region44: #{tpu_custom_call.1} parent=1 // pred_region
      _
    $region45: #{tpu_custom_call.1} parent=1 // pred_fallthru
      _
    // Predicated region
    $region46: #{tpu_custom_call.1} parent=1 // pred_check
      _
    $region47: #{tpu_custom_call.1} parent=1 // pred_check_branch
      %74 = sbr.rel (0) target = $region49
    $region48: #{tpu_custom_call.1} parent=1 // pred_region
      _
    $region49: #{tpu_custom_call.1} parent=1 // pred_fallthru
      _
    // Predicated region
    $region50: #{tpu_custom_call.1} parent=1 // pred_check
      _
    $region51: #{tpu_custom_call.1} parent=1 // pred_check_branch
      %76 = sbr.rel (0) target = $region53
    $region52: #{tpu_custom_call.1} parent=1 // pred_region
      _
    $region53: #{tpu_custom_call.1} parent=1 // pred_fallthru
      _
    // Predicated region
    $region54: #{tpu_custom_call.1} parent=1 // pred_check
      _
    $region55: #{tpu_custom_call.1} parent=1 // pred_check_branch
      %78 = sbr.rel (0) target = $region57
    $region56: #{tpu_custom_call.1} parent=1 // pred_region
      _
    $region57: #{tpu_custom_call.1} parent=1 // pred_fallthru
      _
    // Predicated region
    $region58: #{tpu_custom_call.1} parent=1 // pred_check
      _
    $region59: #{tpu_custom_call.1} parent=1 // pred_check_branch
      %80 = sbr.rel (0) target = $region61
    $region60: #{tpu_custom_call.1} parent=1 // pred_region
      %81 = dma.done [#allocation3], 512
    $region61: #{tpu_custom_call.1} parent=1 // pred_fallthru
      _
    // Predicated region
    $region62: #{tpu_custom_call.1} parent=1 // pred_check
      _
    $region63: #{tpu_custom_call.1} parent=1 // pred_check_branch
      %83 = sbr.rel (0) target = $region65
    $region64: #{tpu_custom_call.1} parent=1 // pred_region
      %84 = dma.done [#allocation5], 16
    $region65: #{tpu_custom_call.1} parent=1 // pred_fallthru
      _
    // Predicated region
    $region66: #{tpu_custom_call.1} parent=1 // pred_check
      _
    $region67: #{tpu_custom_call.1} parent=1 // pred_check_branch
      %86 = sbr.rel (0) target = $region69
    $region68: #{tpu_custom_call.1} parent=1 // pred_region
      %87 = dma.done [#allocation8], 16
    $region69: #{tpu_custom_call.1} parent=1 // pred_fallthru
      _
    %88 = sfence
    %v90 = vld [vmem:[%s0] sm:$0xff]
    %v91 = vld [vmem:[%s0 + $0x8] sm:$0xff]
    %v92 = vpack.c.bf16 %v91, %v90
    %v93 = vld [vmem:[#allocation2] sm:$0xf]
    %v94 = vld [vmem:[#allocation2 + $0x4] sm:$0xf]
    %v95 = vld [vmem:[#allocation2 + $0x8] sm:$0xf]
    %v96 = vld [vmem:[#allocation2 + $0xc] sm:$0xf]
    %v97 = vld [vmem:[#allocation2 + $0x10] sm:$0xf]
    %v98 = vld [vmem:[#allocation2 + $0x14] sm:$0xf]
    %v99 = vld [vmem:[#allocation2 + $0x18] sm:$0xf]
    %v100 = vld [vmem:[#allocation2 + $0x1c] sm:$0xf]
    %v101 = vld [vmem:[%s3] sm:$0x1]
    %v103 = vlaneseq
    %v104 = vshrl.u32 %v103, 7
    %v105 = vsub.s32 0, %v104
    %v106 = vrot.slane %v101, %v105
    %v116 = vunpack.c.l.b16 %v93
    %v117 = vunpack.c.l.b16 %v94
    %v118 = vunpack.c.l.b16 %v95
    %v119 = vunpack.c.l.b16 %v96
    %v120 = vunpack.c.l.b16 %v97
    %v121 = vunpack.c.l.b16 %v98
    %v122 = vunpack.c.l.b16 %v99
    %v123 = vunpack.c.l.b16 %v100
    %v124 = vpack.c.b16 %v117, %v116
    %v125 = vpack.c.b16 %v119, %v118
    %v126 = vpack.c.b16 %v121, %v120
    %v127 = vpack.c.b16 %v123, %v122
    %vm132 = vcmask 523264
    %v134 = vsel %vm132, %v92, 0
    %136 = vmatprep.subr.bf16.mxu0 0
    %137 = vmatpush1.bf16.msra.mxu0 %v124
    %138 = vmatprep.subr.bf16.mxu0 0
    %139 = vmatpush1.bf16.msra.mxu0 %v125
    %140 = vmatprep.subr.bf16.mxu0 0
    %141 = vmatpush1.bf16.msra.mxu0 %v126
    %142 = vmatprep.subr.bf16.mxu0 0
    %143 = vmatpush1.bf16.msra.mxu0 %v127
    %144 = vmatprep.subr.bf16.mxu0 0
    %145 = vmatpush1.bf16.msra.mxu0 0
    %146 = vmatprep.subr.bf16.mxu0 0
    %147 = vmatpush1.bf16.msra.mxu0 0
    %148 = vmatprep.subr.bf16.mxu0 0
    %149 = vmatpush1.bf16.msra.mxu0 0
    %150 = vmatprep.subr.bf16.mxu0 0
    %151 = vmatpush1.bf16.msra.mxu0 0
    %152 = vmatprep.subr.bf16.mxu0 0
    %153 = vmatpush1.bf16.msra.mxu0 0
    %154 = vmatprep.subr.bf16.mxu0 0
    %155 = vmatpush1.bf16.msra.mxu0 0
    %156 = vmatprep.subr.bf16.mxu0 0
    %157 = vmatpush1.bf16.msra.mxu0 0
    %158 = vmatprep.subr.bf16.mxu0 0
    %159 = vmatpush1.bf16.msra.mxu0 0
    %160 = vmatprep.subr.bf16.mxu0 0
    %161 = vmatpush1.bf16.msra.mxu0 0
    %162 = vmatprep.subr.bf16.mxu0 0
    %163 = vmatpush1.bf16.msra.mxu0 0
    %164 = vmatprep.subr.bf16.mxu0 0
    %165 = vmatpush1.bf16.msra.mxu0 0
    %166 = vmatprep.subr.bf16.mxu0 0
    %167 = vmatpush1.bf16.msra.mxu0 0
    %168 = vmatprep.mubr.bf16.mxu0 0
    %169 = vmatmul.mubr.bf16.gmra.mrb[0].mxu0 %v134
    %v170 = vpop.f32.mrb[0].mxu0
    %v171 = vadd.f32 %v106, %v170
    %v172 = vpop.f32.mrb[0].mxu0
    %v173 = vpop.f32.mrb[0].mxu0
    %v174 = vadd.f32 %v106, %v173
    %v175 = vpop.f32.mrb[0].mxu0
    %176 = vdwg.mxu0
    %179 = vrot.lane.b32.xlu0 %v171, 112
    %v180 = vpop.permute.xlu0 %179
    %181 = vrot.lane.b32.xlu0 %v174, 112
    %v182 = vpop.permute.xlu0 %181
    %v185 = vmax.f32 %v171, %v180
    %v186 = vmax.f32 %v174, %v182
    %187 = vrot.lane.b32.xlu0 %v171, 96
    %v188 = vpop.permute.xlu0 %187
    %189 = vrot.lane.b32.xlu0 %v174, 96
    %v190 = vpop.permute.xlu0 %189
    %v193 = vmax.f32 %v185, %v188
    %v194 = vmax.f32 %v186, %v190
    %195 = vrot.lane.b32.xlu0 %v171, 80
    %v196 = vpop.permute.xlu0 %195
    %197 = vrot.lane.b32.xlu0 %v174, 80
    %v198 = vpop.permute.xlu0 %197
    %v201 = vmax.f32 %v193, %v196
    %v202 = vmax.f32 %v194, %v198
    %v203 = vpack.c.bf16 %v202, %v201
    %v204 = vld [vmem:[%s4] sm:$0xf]
    %v205 = vld [vmem:[%s4 + $0x4] sm:$0xf]
    %v206 = vld [vmem:[%s5] sm:$0x1]
    %v208 = vlaneseq
    %v209 = vshrl.u32 %v208, 7
    %v210 = vsub.s32 0, %v209
    %v211 = vrot.slane %v206, %v210
    %v215 = vunpack.c.l.b16 %v204
    %v216 = vunpack.c.l.b16 %v205
    %v217 = vpack.c.b16 %v216, %v215
    %vm219 = vcmask 130048
    %v221 = vsel %vm219, %v203, 0
    %223 = vmatprep.subr.bf16.mxu0 0
    %224 = vmatpush1.bf16.msra.mxu0 %v217
    %225 = vmatprep.subr.bf16.mxu0 0
    %226 = vmatpush1.bf16.msra.mxu0 0
    %227 = vmatprep.subr.bf16.mxu0 0
    %228 = vmatpush1.bf16.msra.mxu0 0
    %229 = vmatprep.subr.bf16.mxu0 0
    %230 = vmatpush1.bf16.msra.mxu0 0
    %231 = vmatprep.subr.bf16.mxu0 0
    %232 = vmatpush1.bf16.msra.mxu0 0
    %233 = vmatprep.subr.bf16.mxu0 0
    %234 = vmatpush1.bf16.msra.mxu0 0
    %235 = vmatprep.subr.bf16.mxu0 0
    %236 = vmatpush1.bf16.msra.mxu0 0
    %237 = vmatprep.subr.bf16.mxu0 0
    %238 = vmatpush1.bf16.msra.mxu0 0
    %239 = vmatprep.subr.bf16.mxu0 0
    %240 = vmatpush1.bf16.msra.mxu0 0
    %241 = vmatprep.subr.bf16.mxu0 0
    %242 = vmatpush1.bf16.msra.mxu0 0
    %243 = vmatprep.subr.bf16.mxu0 0
    %244 = vmatpush1.bf16.msra.mxu0 0
    %245 = vmatprep.subr.bf16.mxu0 0
    %246 = vmatpush1.bf16.msra.mxu0 0
    %247 = vmatprep.subr.bf16.mxu0 0
    %248 = vmatpush1.bf16.msra.mxu0 0
    %249 = vmatprep.subr.bf16.mxu0 0
    %250 = vmatpush1.bf16.msra.mxu0 0
    %251 = vmatprep.subr.bf16.mxu0 0
    %252 = vmatpush1.bf16.msra.mxu0 0
    %253 = vmatprep.subr.bf16.mxu0 0
    %254 = vmatpush1.bf16.msra.mxu0 0
    %255 = vmatprep.mubr.bf16.mxu0 0
    %256 = vmatmul.mubr.bf16.gmra.mrb[0].mxu0 %v221
    %v257 = vpop.f32.mrb[0].mxu0
    %v258 = vadd.f32 %v211, %v257
    %v259 = vpop.f32.mrb[0].mxu0
    %v260 = vpop.f32.mrb[0].mxu0
    %v261 = vadd.f32 %v211, %v260
    %v262 = vpop.f32.mrb[0].mxu0
    %263 = vdwg.mxu0
    %v264 = vld [vmem:[%s1] sm:$0xff]
    %v265 = vld [vmem:[%s1 + $0x8] sm:$0xff]
    %v266 = vmul.f32 %v258, 0.5
    %v267 = vmul.f32 %v261, 0.5
    %v268 = vmul.f32 %v266, 1.442695
    %v269 = vpow.pop %v268
    %v270 = vmul.f32 %v267, 1.442695
    %v271 = vpow.pop %v270
    %274 = vrot.lane.b32.xlu0 %v269, 120
    %v275 = vpop.permute.xlu0 %274
    %276 = vrot.lane.b32.xlu0 %v271, 120
    %v277 = vpop.permute.xlu0 %276
    %v280 = vmul.f32 %v264, %v275
    %v281 = vmul.f32 %v265, %v277
    %v282 = vadd.f32 %v258, %v280
    %v283 = vadd.f32 %v261, %v281
    %v284 = vld [vmem:[%s6] sm:$0x1]
    %v285 = vld [vmem:[%s7] sm:$0x1]
    %v286 = vlaneseq
    %v287 = vshrl.u32 %v286, 7
    %v288 = vsub.s32 0, %v287
    %v289 = vrot.slane %v285, %v288
    %v290 = vmul.f32 %v282, %v289
    %v291 = vmul.f32 %v283, %v289
    %vm292 = vcmask 64512
    %v293 = vsel %vm292, %v290, 0.0
    %294 = vadd.xlane.f32.xlu0 %v293
    %v295 = vpop.xlane.xlu0 %294
    %v296 = vsel %vm292, %v291, 0.0
    %297 = vadd.xlane.f32.xlu0 %v296
    %v298 = vpop.xlane.xlu0 %297
    %s299 = sld [smem:[#allocation6]]
    %v300 = vstv %s299
    %v301 = vadd.f32 %v295, %v300
    %v302 = vadd.f32 %v298, %v300
    %v303 = vtanh.pop %v301
    %v304 = vtanh.pop %v302
    %v305 = vlaneseq
    %v306 = vshrl.u32 %v305, 7
    %v307 = vsub.s32 0, %v306
    %v308 = vrot.slane %v284, %v307
    %v309 = vmul.f32 %v308, %v303
    %v310 = vmul.f32 %v308, %v304
    %v311 = vadd.f32 %v282, %v309
    %v312 = vadd.f32 %v283, %v310
    %v313 = vmul.f32 %v303, %v303
    %v314 = vmul.f32 %v304, %v304
    %v315 = vsub.f32 1.0, %v313
    %v316 = vsub.f32 1.0, %v314
    %s317 = sld [smem:[#allocation7]]
    %v318 = vstv %s317
    %v319 = vmul.f32 %v315, %v318
    %v320 = vmul.f32 %v316, %v318
    %v321 = vadd.f32 %v319, 1.0
    %v322 = vadd.f32 %v320, 1.0
    %v323 = vand.u32 2147483647, %v321
    %v324 = vand.u32 2147483647, %v322
    %v325 = vlog2.pop %v323
    %v326 = vmul.f32 %v325, 0.6931472
    %v327 = vlog2.pop %v324
    %v328 = vmul.f32 %v327, 0.6931472
    %v329 = vadd.f32 %v326, 0.0
    %v330 = vadd.f32 %v328, 0.0
    %v331 = vld [vmem:[%s6 + $0x1] sm:$0x1]
    %v332 = vld [vmem:[%s7 + $0x1] sm:$0x1]
    %v333 = vlaneseq
    %v334 = vshrl.u32 %v333, 7
    %v335 = vsub.s32 0, %v334
    %v336 = vrot.slane %v332, %v335
    %v337 = vmul.f32 %v311, %v336
    %v338 = vmul.f32 %v312, %v336
    %v339 = vsel %vm292, %v337, 0.0
    %340 = vadd.xlane.f32.xlu0 %v339
    %v341 = vpop.xlane.xlu0 %340
    %v342 = vsel %vm292, %v338, 0.0
    %343 = vadd.xlane.f32.xlu0 %v342
    %v344 = vpop.xlane.xlu0 %343
    %s345 = sld [smem:[#allocation6 + $0x1]]
    %v346 = vstv %s345
    %v347 = vadd.f32 %v341, %v346
    %v348 = vadd.f32 %v344, %v346
    %v349 = vtanh.pop %v347
    %v350 = vtanh.pop %v348
    %v351 = vlaneseq
    %v352 = vshrl.u32 %v351, 7
    %v353 = vsub.s32 0, %v352
    %v354 = vrot.slane %v331, %v353
    %v355 = vmul.f32 %v354, %v349
    %v356 = vmul.f32 %v354, %v350
    %v357 = vadd.f32 %v311, %v355
    %v358 = vadd.f32 %v312, %v356
    %v359 = vmul.f32 %v349, %v349
    %v360 = vmul.f32 %v350, %v350
    %v361 = vsub.f32 1.0, %v359
    %v362 = vsub.f32 1.0, %v360
    %s363 = sld [smem:[#allocation7 + $0x1]]
    %v364 = vstv %s363
    %v365 = vmul.f32 %v361, %v364
    %v366 = vmul.f32 %v362, %v364
    %v367 = vadd.f32 %v365, 1.0
    %v368 = vadd.f32 %v366, 1.0
    %v369 = vand.u32 2147483647, %v367
    %v370 = vand.u32 2147483647, %v368
    %v371 = vlog2.pop %v369
    %v372 = vmul.f32 %v371, 0.6931472
    %v373 = vlog2.pop %v370
    %v374 = vmul.f32 %v373, 0.6931472
    %v375 = vadd.f32 %v329, %v372
    %v376 = vadd.f32 %v330, %v374
    %v377 = vpack.c.bf16 %v358, %v357
    %v378 = vld [vmem:[%s10] sm:$0xf]
    %v379 = vld [vmem:[%s11] sm:$0x1]
    %v381 = vlaneseq
    %v382 = vshrl.u32 %v381, 7
    %v383 = vsub.s32 0, %v382
    %v384 = vrot.slane %v379, %v383
    %v387 = vsel %vm292, %v377, 0
    %vm389 = vcmask 1043456
    %v391 = vsel %vm389, %v378, 0
    %393 = vmatprep.subr.bf16.mxu0 0
    %394 = vmatpush1.bf16.msra.mxu0 %v391
    %395 = vmatprep.subr.bf16.mxu0 0
    %396 = vmatpush1.bf16.msra.mxu0 0
    %397 = vmatprep.subr.bf16.mxu0 0
    %398 = vmatpush1.bf16.msra.mxu0 0
    %399 = vmatprep.subr.bf16.mxu0 0
    %400 = vmatpush1.bf16.msra.mxu0 0
    %401 = vmatprep.subr.bf16.mxu0 0
    %402 = vmatpush1.bf16.msra.mxu0 0
    %403 = vmatprep.subr.bf16.mxu0 0
    %404 = vmatpush1.bf16.msra.mxu0 0
    %405 = vmatprep.subr.bf16.mxu0 0
    %406 = vmatpush1.bf16.msra.mxu0 0
    %407 = vmatprep.subr.bf16.mxu0 0
    %408 = vmatpush1.bf16.msra.mxu0 0
    %409 = vmatprep.subr.bf16.mxu0 0
    %410 = vmatpush1.bf16.msra.mxu0 0
    %411 = vmatprep.subr.bf16.mxu0 0
    %412 = vmatpush1.bf16.msra.mxu0 0
    %413 = vmatprep.subr.bf16.mxu0 0
    %414 = vmatpush1.bf16.msra.mxu0 0
    %415 = vmatprep.subr.bf16.mxu0 0
    %416 = vmatpush1.bf16.msra.mxu0 0
    %417 = vmatprep.subr.bf16.mxu0 0
    %418 = vmatpush1.bf16.msra.mxu0 0
    %419 = vmatprep.subr.bf16.mxu0 0
    %420 = vmatpush1.bf16.msra.mxu0 0
    %421 = vmatprep.subr.bf16.mxu0 0
    %422 = vmatpush1.bf16.msra.mxu0 0
    %423 = vmatprep.subr.bf16.mxu0 0
    %424 = vmatpush1.bf16.msra.mxu0 0
    %425 = vmatprep.mubr.bf16.mxu0 0
    %426 = vmatmul.mubr.bf16.gmra.mrb[0].mxu0 %v387
    %v427 = vpop.f32.mrb[0].mxu0
    %v428 = vadd.f32 %v384, %v427
    %v429 = vpop.f32.mrb[0].mxu0
    %v430 = vpop.f32.mrb[0].mxu0
    %v431 = vadd.f32 %v384, %v430
    %v432 = vpop.f32.mrb[0].mxu0
    %433 = vdwg.mxu0
    %436 = vrot.lane.b32.xlu0 %v428, 112
    %v437 = vpop.permute.xlu0 %436
    %438 = vrot.lane.b32.xlu0 %v431, 112
    %v439 = vpop.permute.xlu0 %438
    %v442 = vmax.f32 %v428, %v437
    %v443 = vmax.f32 %v431, %v439
    %444 = vrot.lane.b32.xlu0 %v428, 96
    %v445 = vpop.permute.xlu0 %444
    %446 = vrot.lane.b32.xlu0 %v431, 96
    %v447 = vpop.permute.xlu0 %446
    %v450 = vmax.f32 %v442, %v445
    %v451 = vmax.f32 %v443, %v447
    %452 = vrot.lane.b32.xlu0 %v428, 80
    %v453 = vpop.permute.xlu0 %452
    %454 = vrot.lane.b32.xlu0 %v431, 80
    %v455 = vpop.permute.xlu0 %454
    %v458 = vmax.f32 %v450, %v453
    %v459 = vmax.f32 %v451, %v455
    %v460 = vpack.c.bf16 %v459, %v458
    %v461 = vld [vmem:[%s12] sm:$0xf]
    %v462 = vld [vmem:[%s12 + $0x4] sm:$0xf]
    %v463 = vld [vmem:[%s13] sm:$0x1]
    %v465 = vlaneseq
    %v466 = vshrl.u32 %v465, 7
    %v467 = vsub.s32 0, %v466
    %v468 = vrot.slane %v463, %v467
    %v472 = vunpack.c.l.b16 %v461
    %v473 = vunpack.c.l.b16 %v462
    %v474 = vpack.c.b16 %v473, %v472
    %v477 = vsel %vm219, %v460, 0
    %479 = vmatprep.subr.bf16.mxu0 0
    %480 = vmatpush1.bf16.msra.mxu0 %v474
    %481 = vmatprep.subr.bf16.mxu0 0
    %482 = vmatpush1.bf16.msra.mxu0 0
    %483 = vmatprep.subr.bf16.mxu0 0
    %484 = vmatpush1.bf16.msra.mxu0 0
    %485 = vmatprep.subr.bf16.mxu0 0
    %486 = vmatpush1.bf16.msra.mxu0 0
    %487 = vmatprep.subr.bf16.mxu0 0
    %488 = vmatpush1.bf16.msra.mxu0 0
    %489 = vmatprep.subr.bf16.mxu0 0
    %490 = vmatpush1.bf16.msra.mxu0 0
    %491 = vmatprep.subr.bf16.mxu0 0
    %492 = vmatpush1.bf16.msra.mxu0 0
    %493 = vmatprep.subr.bf16.mxu0 0
    %494 = vmatpush1.bf16.msra.mxu0 0
    %495 = vmatprep.subr.bf16.mxu0 0
    %496 = vmatpush1.bf16.msra.mxu0 0
    %497 = vmatprep.subr.bf16.mxu0 0
    %498 = vmatpush1.bf16.msra.mxu0 0
    %499 = vmatprep.subr.bf16.mxu0 0
    %500 = vmatpush1.bf16.msra.mxu0 0
    %501 = vmatprep.subr.bf16.mxu0 0
    %502 = vmatpush1.bf16.msra.mxu0 0
    %503 = vmatprep.subr.bf16.mxu0 0
    %504 = vmatpush1.bf16.msra.mxu0 0
    %505 = vmatprep.subr.bf16.mxu0 0
    %506 = vmatpush1.bf16.msra.mxu0 0
    %507 = vmatprep.subr.bf16.mxu0 0
    %508 = vmatpush1.bf16.msra.mxu0 0
    %509 = vmatprep.subr.bf16.mxu0 0
    %510 = vmatpush1.bf16.msra.mxu0 0
    %511 = vmatprep.mubr.bf16.mxu0 0
    %512 = vmatmul.mubr.bf16.gmra.mrb[0].mxu0 %v477
    %v513 = vpop.f32.mrb[0].mxu0
    %v514 = vadd.f32 %v468, %v513
    %v515 = vpop.f32.mrb[0].mxu0
    %v516 = vpop.f32.mrb[0].mxu0
    %v517 = vadd.f32 %v468, %v516
    %v518 = vpop.f32.mrb[0].mxu0
    %519 = vdwg.mxu0
    %v520 = vxor.u32 %v514, 2147483648
    %v521 = vxor.u32 %v517, 2147483648
    %v522 = vmul.f32 %v520, 1.442695
    %v523 = vpow.pop %v522
    %v524 = vmul.f32 %v521, 1.442695
    %v525 = vpow.pop %v524
    %v526 = vadd.f32 %v523, 1.0
    %v527 = vadd.f32 %v525, 1.0
    %v528 = vrcp.pop %v526
    %v529 = vmul.f32 1.0, %v528
    %v530 = vrcp.pop %v527
    %v531 = vmul.f32 1.0, %v530
    %532 = vst.msk [vmem:[#allocation9] sm:$0xff] %vm132, %v529
    %533 = vst.msk [vmem:[#allocation9 + $0x8] sm:$0xff] %vm132, %v531
    %v534 = vmul.f32 %v264, -0.5
    %v535 = vmul.f32 %v265, -0.5
    %v536 = vmul.f32 %v534, %v264
    %v537 = vmul.f32 %v535, %v265
    %540 = vrot.lane.b32.xlu0 %v266, 120
    %v541 = vpop.permute.xlu0 %540
    %542 = vrot.lane.b32.xlu0 %v267, 120
    %v543 = vpop.permute.xlu0 %542
    %v546 = vsub.f32 %v536, %v541
    %v547 = vsub.f32 %v537, %v543
    %v548 = vsel %vm292, %v546, 0.0
    %549 = vadd.xlane.f32.xlu0 %v548
    %v550 = vpop.xlane.xlu0 %549
    %v551 = vsel %vm292, %v547, 0.0
    %552 = vadd.xlane.f32.xlu0 %v551
    %v553 = vpop.xlane.xlu0 %552
    %v554 = vsub.f32 %v550, 7.351508
    %v555 = vsub.f32 %v553, 7.351508
    %v556 = vmul.f32 %v357, -0.5
    %v557 = vmul.f32 %v358, -0.5
    %v558 = vmul.f32 %v556, %v357
    %v559 = vmul.f32 %v557, %v358
    %v560 = vsel %vm292, %v558, 0.0
    %561 = vadd.xlane.f32.xlu0 %v560
    %v562 = vpop.xlane.xlu0 %561
    %v563 = vsel %vm292, %v559, 0.0
    %564 = vadd.xlane.f32.xlu0 %v563
    %v565 = vpop.xlane.xlu0 %564
    %v566 = vsub.f32 %v562, 7.351508
    %v567 = vsub.f32 %v565, 7.351508
    %v568 = vlaneseq
    %v569 = vand.u32 %v568, 127
    %vm570 = vcmp.eq.s32.totalorder %v569, 0
    %vm571 = vcmp.eq.s32.totalorder %v569, 1
    %v572 = vsel %vm571, %v566, %v375
    %v573 = vsel %vm571, %v567, %v376
    %v574 = vsel %vm570, %v554, %v572
    %v575 = vsel %vm570, %v555, %v573
    %vm576 = vcmask 23552
    %577 = vst.msk [vmem:[%s15] sm:$0xff] %vm576, %v574
    %578 = vst.msk [vmem:[%s15 + $0x8] sm:$0xff] %vm576, %v575
    // Predicated region
    $region70: #{tpu_custom_call.1} parent=1 // pred_check
      _
    $region71: #{tpu_custom_call.1} parent=1 // pred_check_branch
      %580 = sbr.rel (0) target = $region73
    $region72: #{tpu_custom_call.1} parent=1 // pred_region
      %s582 = ssub.s32 256, 256
      %583 = vsyncadd [#allocation4], %s582
      %s584 = sshll.u32 [#allocation9], 4
      %s585 = int_to_ptr.vmem [resolvable:$true] %s584
      %590 = dma.vmem_to_hbm [thread:$0]  %s585, 256, %s14, [#allocation4], 128, 128, 8
    $region73: #{tpu_custom_call.1} parent=1 // pred_fallthru
      _
    // Predicated region
    $region74: #{tpu_custom_call.1} parent=1 // pred_check
      _
    $region75: #{tpu_custom_call.1} parent=1 // pred_check_branch
      %592 = sbr.rel (0) target = $region77
    $region76: #{tpu_custom_call.1} parent=1 // pred_region
      _
    $region77: #{tpu_custom_call.1} parent=1 // pred_fallthru
      _
    // Predicated region
    $region78: #{tpu_custom_call.1} parent=1 // pred_check
      _
    $region79: #{tpu_custom_call.1} parent=1 // pred_check_branch
      %594 = sbr.rel (0) target = $region81
    $region80: #{tpu_custom_call.1} parent=1 // pred_region
      %595 = dma.done [#allocation4], 256
    $region81: #{tpu_custom_call.1} parent=1 // pred_fallthru
      _
    // Predicated region
    $region82: #{tpu_custom_call.1} parent=1 // pred_check
      _
    $region83: #{tpu_custom_call.1} parent=1 // pred_check_branch
      %597 = sbr.rel (0) target = $region85
    $region84: #{tpu_custom_call.1} parent=1 // pred_region
      _
    $region85: #{tpu_custom_call.1} parent=1 // pred_fallthru
      _
    %598 = vsyncpa [#allocation3], 1
    %599 = vsyncpa [#allocation4], 1
    %600 = vsyncpa [#allocation5], 1
    %601 = vsyncpa [#allocation8], 1

</llo_original>
